<compile_context>
chip_gen: v7x
topology: tpu7x:2x2x1
jax: 0.10.0
libtpu: 0.0.40
codegen_flags: <defaults>
</compile_context>

<pallas_src>
import math
import functools

import numpy as np
import jax
import jax.numpy as jnp
from jax.experimental import pallas as pl
from jax.experimental.pallas import tpu as pltpu  # noqa: F401  (TPU backend; no pltpu-specific ops needed at this size)


# ----------------------------------------------------------------------------- kernel

def decoder_rnn_kernel(x_ref, w_ref, o_ref, *, B, T, D, H, F):
    """Fused DecoderRNN forward for the whole batch (single block, no grid).

    x_ref : (T*B, D)      time-major tokens (row t*B + b == batch b, step t), f32
    w_ref : (D+2H+4, W)   packed parameter slab, W = max(4H, F, 128):
              rows [0, D)       : w_ih   (i/f/o gate columns pre-scaled by 0.5)
              rows [D, D+H)     : w_hh   (same pre-scaling)
              rows [D+H, D+2H)  : fc1_w
              row  D+2H         : b_ih + b_hh (pre-scaled)
              row  D+2H + 1     : fc1 bias
              row  D+2H + 2     : fc2 weight (transposed to a lane row)
              row  D+2H + 3     : fc2 bias (column 0)
    o_ref : (B, W)        lane-dense output; every column carries the scalar
                          (wrapper reads column 0) -> unmasked store.
    """
    G = 4 * H
    R = D + 2 * H

    w_ih   = w_ref[0:D, 0:G]
    w_hh   = w_ref[D:D + H, 0:G]
    fc1_w  = w_ref[D + H:R, 0:F]
    b_lstm = w_ref[R:R + 1, 0:G]
    b_fc1  = w_ref[R + 1:R + 2, 0:F]
    fc2_w  = w_ref[R + 2:R + 3, 0:F]
    fc2_b  = w_ref[R + 3:R + 4, 0:1]

    # Input projection for every (t, b) token in one lane-dense MXU matmul.
    xp = jnp.dot(x_ref[...], w_ih,
                 preferred_element_type=jnp.float32) + b_lstm              # (T*B, 4H)

    h = jnp.zeros((B, H), jnp.float32)
    c = jnp.zeros((B, H), jnp.float32)

    # T is small & static -> unrolled recurrence (scheduler sees the whole serial chain).
    # TODO(synk): could hold w_hh in MXU staging registers across the T steps via
    # pltpu.matmul_push_rhs / matmul_acc_lhs / matmul_pop; kept the portable jnp.dot form.
    for t in range(T):
        gates = xp[t * B:(t + 1) * B, :] + jnp.dot(
            h, w_hh, preferred_element_type=jnp.float32)                   # (B, 4H)
        # ONE full-vreg tanh for all four gates: the i/f/o columns were pre-scaled
        # by 0.5 at pack time, so sigmoid(z) == 0.5 * tanh(z/2) + 0.5 exactly.
        tg = jnp.tanh(gates)
        sg = 0.5 * tg + 0.5
        i_g = sg[:, 0 * H:1 * H]
        f_g = sg[:, 1 * H:2 * H]
        g_g = tg[:, 2 * H:3 * H]
        o_g = sg[:, 3 * H:4 * H]
        c = f_g * c + i_g * g_g
        h = o_g * jnp.tanh(c)

    # fc head on the last hidden state (== RNN_out[:, -1, :] for a 1-layer LSTM).
    y = jnp.maximum(
        jnp.dot(h, fc1_w, preferred_element_type=jnp.float32) + b_fc1, 0.0)  # (B, F)
    # TODO(synk): F.dropout(p=0.3) is identity at inference (training=False); omitted.

    # fc2 (F -> 1): VPU broadcast-multiply + XLU lane reduction instead of a padded
    # (F, 128) MXU pass (avoids DMAing a 64 KB all-zero weight slab).
    scalar = jnp.sum(y * fc2_w, axis=1, keepdims=True) + fc2_b               # (B, 1)
    o_ref[...] = jnp.broadcast_to(scalar, o_ref.shape).astype(o_ref.dtype)


# ----------------------------------------------------------------------------- packing / wrapper

def pack_params(params):
    """One-time (init-path) packing of every module parameter into a single
    lane-dense slab. Also folds the 0.5 sigmoid-via-tanh scale into the i/f/o
    gate columns so the kernel needs only one tanh per recurrence step."""
    D, G = params["w_ih"].shape
    H = params["w_hh"].shape[0]
    F = params["fc1_w"].shape[1]
    W = max(G, F, 128)

    gate_scale = jnp.concatenate(
        [jnp.full((1, H), 0.5, jnp.float32), jnp.full((1, H), 0.5, jnp.float32),
         jnp.ones((1, H), jnp.float32), jnp.full((1, H), 0.5, jnp.float32)],
        axis=1)                                                             # (1, 4H)

    def row_pad(a):
        return jnp.pad(a, ((0, 0), (0, W - a.shape[1])))

    w_slab = jnp.concatenate([
        row_pad(params["w_ih"] * gate_scale),        # (D, W)
        row_pad(params["w_hh"] * gate_scale),        # (H, W)
        row_pad(params["fc1_w"]),                    # (H, W)
        row_pad(params["b_lstm"] * gate_scale),      # (1, W)
        row_pad(params["fc1_b"]),                    # (1, W)
        row_pad(params["fc2_w"].T),                  # (1, W)
        row_pad(params["fc2_b"]),                    # (1, W)
    ], axis=0).astype(jnp.float32)                   # (D + 2H + 4, W)

    return w_slab, dict(H=H, F=F)


@functools.partial(jax.jit, static_argnames=("H", "F"))
def decoder_rnn_forward(x, w_slab, *, H, F):
    """x: (B, T, D) batch-first; returns (B, 1) like the PyTorch module."""
    B, T, D = x.shape
    W = w_slab.shape[1]

    # Layout plumbing fused inside this jit: time-major flatten so each unrolled
    # recurrence step reads a contiguous row slice of the precomputed projection.
    x_tb = jnp.transpose(x, (1, 0, 2)).reshape(T * B, D).astype(jnp.float32)

    out_pad = pl.pallas_call(
        functools.partial(decoder_rnn_kernel, B=B, T=T, D=D, H=H, F=F),
        out_shape=jax.ShapeDtypeStruct((B, W), jnp.float32),
    )(x_tb, w_slab)

    return out_pad[:, :1]


# ----------------------------------------------------------------------------- params / reference

def init_params(key, D, H, F):
    ks = jax.random.split(key, 5)
    s = 1.0 / math.sqrt(H)
    return {
        # weights stored as (in_features, out_features); LSTM gate order i, f, g, o
        "w_ih": s * jax.random.normal(ks[0], (D, 4 * H), jnp.float32),
        "w_hh": s * jax.random.normal(ks[1], (H, 4 * H), jnp.float32),
        "b_lstm": s * jax.random.normal(ks[2], (1, 4 * H), jnp.float32),   # b_ih + b_hh folded
        "fc1_w": s * jax.random.normal(ks[3], (H, F), jnp.float32),
        "fc1_b": jnp.zeros((1, F), jnp.float32),
        "fc2_w": s * jax.random.normal(ks[4], (F, 1), jnp.float32),
        "fc2_b": jnp.zeros((1, 1), jnp.float32),
    }


def reference_forward(x, params):
    """Pure-JAX reference implementing the exact same math (PyTorch LSTM semantics)."""
    B, T, D = x.shape
    H = params["w_hh"].shape[0]
    h = jnp.zeros((B, H), jnp.float32)
    c = jnp.zeros((B, H), jnp.float32)
    for t in range(T):
        g = x[:, t, :] @ params["w_ih"] + h @ params["w_hh"] + params["b_lstm"]
        i = jax.nn.sigmoid(g[:, 0 * H:1 * H])
        f = jax.nn.sigmoid(g[:, 1 * H:2 * H])
        gg = jnp.tanh(g[:, 2 * H:3 * H])
        o = jax.nn.sigmoid(g[:, 3 * H:4 * H])
        c = f * c + i * gg
        h = o * jnp.tanh(c)
    y = jnp.maximum(h @ params["fc1_w"] + params["fc1_b"], 0.0)
    return y @ params["fc2_w"] + params["fc2_b"]


# ----------------------------------------------------------------------------- main

if __name__ == "__main__":
    B, T = 2, 8
    CNN_EMBED_DIM = 32      # input_size  (small stand-in for 256)
    H_RNN = 32              # hidden_size -> 4H = 128, lane-dense gate slab
    H_FC_DIM = 128          # fc1 width (module default, naturally lane-dense)

    key = jax.random.PRNGKey(0)
    kx, kp = jax.random.split(key)
    x = jax.random.normal(kx, (B, T, CNN_EMBED_DIM), jnp.float32)
    params = init_params(kp, CNN_EMBED_DIM, H_RNN, H_FC_DIM)

    # One-time packing (init path) -> per-call path is a single jitted executable.
    w_slab, hp = pack_params(params)
    w_slab = jax.block_until_ready(w_slab)

    out = jax.block_until_ready(decoder_rnn_forward(x, w_slab, H=hp["H"], F=hp["F"]))
    assert out.shape == (B, 1)

    ref = jax.block_until_ready(reference_forward(x, params))
    np.testing.assert_allclose(np.asarray(out), np.asarray(ref), rtol=1e-3, atol=1e-3)

    print("KERNEL_OK")
</pallas_src>

<mosaic_0001>
module attributes {stable_mosaic.version = 11 : i64} {
  func.func @decoder_rnn_kernel(%arg0: memref<16x32xf32, #tpu.memory_space<vmem>>, %arg1: memref<100x128xf32, #tpu.memory_space<vmem>>, %arg2: memref<2x128xf32, #tpu.memory_space<vmem>>) attributes {dimension_semantics = [], scalar_prefetch = 0 : i64, scratch_operands = 0 : i64, tpu.core_type = #tpu.core_type<tc>} {
    %c0 = arith.constant 0 : index
    %c0_0 = arith.constant 0 : index
    %0 = vector.load %arg1[%c0, %c0_0] : memref<100x128xf32, #tpu.memory_space<vmem>>, vector<32x128xf32>
    %c32 = arith.constant 32 : index
    %c0_1 = arith.constant 0 : index
    %1 = vector.load %arg1[%c32, %c0_1] : memref<100x128xf32, #tpu.memory_space<vmem>>, vector<32x128xf32>
    %c64 = arith.constant 64 : index
    %c0_2 = arith.constant 0 : index
    %2 = vector.load %arg1[%c64, %c0_2] : memref<100x128xf32, #tpu.memory_space<vmem>>, vector<32x128xf32>
    %c96 = arith.constant 96 : index
    %c0_3 = arith.constant 0 : index
    %3 = vector.load %arg1[%c96, %c0_3] : memref<100x128xf32, #tpu.memory_space<vmem>>, vector<1x128xf32>
    %c97 = arith.constant 97 : index
    %c0_4 = arith.constant 0 : index
    %4 = vector.load %arg1[%c97, %c0_4] : memref<100x128xf32, #tpu.memory_space<vmem>>, vector<1x128xf32>
    %c98 = arith.constant 98 : index
    %c0_5 = arith.constant 0 : index
    %5 = vector.load %arg1[%c98, %c0_5] : memref<100x128xf32, #tpu.memory_space<vmem>>, vector<1x128xf32>
    %c99 = arith.constant 99 : index
    %c0_6 = arith.constant 0 : index
    %6 = vector.load %arg1[%c99, %c0_6] : memref<100x128xf32, #tpu.memory_space<vmem>>, vector<1x1xf32>
    %c0_7 = arith.constant 0 : index
    %c0_8 = arith.constant 0 : index
    %7 = vector.load %arg0[%c0_7, %c0_8] : memref<16x32xf32, #tpu.memory_space<vmem>>, vector<16x32xf32>
    %cst = arith.constant dense<0.000000e+00> : vector<16x128xf32>
    %8 = tpu.matmul %7, %0, %cst {dimension_numbers = #tpu.dot_dimension_numbers<[1], [0], [0], [1], [0, 0, 1, 1], [], []>} : vector<16x32xf32>, vector<32x128xf32>, vector<16x128xf32> -> vector<16x128xf32>
    %9 = vector.broadcast %3 : vector<1x128xf32> to vector<16x128xf32>
    %10 = arith.addf %8, %9 : vector<16x128xf32>
    %cst_9 = arith.constant 0.000000e+00 : f32
    %11 = vector.broadcast %cst_9 : f32 to vector<2x32xf32>
    %cst_10 = arith.constant 0.000000e+00 : f32
    %12 = vector.broadcast %cst_10 : f32 to vector<2x32xf32>
    %13 = vector.extract_strided_slice %10 {offsets = [0, 0], sizes = [2, 128], strides = [1, 1]} : vector<16x128xf32> to vector<2x128xf32>
    %cst_11 = arith.constant dense<0.000000e+00> : vector<2x128xf32>
    %14 = tpu.matmul %11, %1, %cst_11 {dimension_numbers = #tpu.dot_dimension_numbers<[1], [0], [0], [1], [0, 0, 1, 1], [], []>} : vector<2x32xf32>, vector<32x128xf32>, vector<2x128xf32> -> vector<2x128xf32>
    %15 = arith.addf %13, %14 : vector<2x128xf32>
    %16 = math.tanh %15 : vector<2x128xf32>
    %cst_12 = arith.constant 5.000000e-01 : f32
    %17 = vector.broadcast %cst_12 : f32 to vector<2x128xf32>
    %18 = arith.mulf %17, %16 : vector<2x128xf32>
    %cst_13 = arith.constant 5.000000e-01 : f32
    %19 = vector.broadcast %cst_13 : f32 to vector<2x128xf32>
    %20 = arith.addf %18, %19 : vector<2x128xf32>
    %21 = vector.extract_strided_slice %20 {offsets = [0, 0], sizes = [2, 32], strides = [1, 1]} : vector<2x128xf32> to vector<2x32xf32>
    %22 = vector.extract_strided_slice %20 {offsets = [0, 32], sizes = [2, 32], strides = [1, 1]} : vector<2x128xf32> to vector<2x32xf32>
    %23 = vector.extract_strided_slice %16 {offsets = [0, 64], sizes = [2, 32], strides = [1, 1]} : vector<2x128xf32> to vector<2x32xf32>
    %24 = vector.extract_strided_slice %20 {offsets = [0, 96], sizes = [2, 32], strides = [1, 1]} : vector<2x128xf32> to vector<2x32xf32>
    %25 = arith.mulf %22, %12 : vector<2x32xf32>
    %26 = arith.mulf %21, %23 : vector<2x32xf32>
    %27 = arith.addf %25, %26 : vector<2x32xf32>
    %28 = math.tanh %27 : vector<2x32xf32>
    %29 = arith.mulf %24, %28 : vector<2x32xf32>
    %30 = vector.extract_strided_slice %10 {offsets = [2, 0], sizes = [2, 128], strides = [1, 1]} : vector<16x128xf32> to vector<2x128xf32>
    %cst_14 = arith.constant dense<0.000000e+00> : vector<2x128xf32>
    %31 = tpu.matmul %29, %1, %cst_14 {dimension_numbers = #tpu.dot_dimension_numbers<[1], [0], [0], [1], [0, 0, 1, 1], [], []>} : vector<2x32xf32>, vector<32x128xf32>, vector<2x128xf32> -> vector<2x128xf32>
    %32 = arith.addf %30, %31 : vector<2x128xf32>
    %33 = math.tanh %32 : vector<2x128xf32>
    %cst_15 = arith.constant 5.000000e-01 : f32
    %34 = vector.broadcast %cst_15 : f32 to vector<2x128xf32>
    %35 = arith.mulf %34, %33 : vector<2x128xf32>
    %cst_16 = arith.constant 5.000000e-01 : f32
    %36 = vector.broadcast %cst_16 : f32 to vector<2x128xf32>
    %37 = arith.addf %35, %36 : vector<2x128xf32>
    %38 = vector.extract_strided_slice %37 {offsets = [0, 0], sizes = [2, 32], strides = [1, 1]} : vector<2x128xf32> to vector<2x32xf32>
    %39 = vector.extract_strided_slice %37 {offsets = [0, 32], sizes = [2, 32], strides = [1, 1]} : vector<2x128xf32> to vector<2x32xf32>
    %40 = vector.extract_strided_slice %33 {offsets = [0, 64], sizes = [2, 32], strides = [1, 1]} : vector<2x128xf32> to vector<2x32xf32>
    %41 = vector.extract_strided_slice %37 {offsets = [0, 96], sizes = [2, 32], strides = [1, 1]} : vector<2x128xf32> to vector<2x32xf32>
    %42 = arith.mulf %39, %27 : vector<2x32xf32>
    %43 = arith.mulf %38, %40 : vector<2x32xf32>
    %44 = arith.addf %42, %43 : vector<2x32xf32>
    %45 = math.tanh %44 : vector<2x32xf32>
    %46 = arith.mulf %41, %45 : vector<2x32xf32>
    %47 = vector.extract_strided_slice %10 {offsets = [4, 0], sizes = [2, 128], strides = [1, 1]} : vector<16x128xf32> to vector<2x128xf32>
    %cst_17 = arith.constant dense<0.000000e+00> : vector<2x128xf32>
    %48 = tpu.matmul %46, %1, %cst_17 {dimension_numbers = #tpu.dot_dimension_numbers<[1], [0], [0], [1], [0, 0, 1, 1], [], []>} : vector<2x32xf32>, vector<32x128xf32>, vector<2x128xf32> -> vector<2x128xf32>
    %49 = arith.addf %47, %48 : vector<2x128xf32>
    %50 = math.tanh %49 : vector<2x128xf32>
    %cst_18 = arith.constant 5.000000e-01 : f32
    %51 = vector.broadcast %cst_18 : f32 to vector<2x128xf32>
    %52 = arith.mulf %51, %50 : vector<2x128xf32>
    %cst_19 = arith.constant 5.000000e-01 : f32
    %53 = vector.broadcast %cst_19 : f32 to vector<2x128xf32>
    %54 = arith.addf %52, %53 : vector<2x128xf32>
    %55 = vector.extract_strided_slice %54 {offsets = [0, 0], sizes = [2, 32], strides = [1, 1]} : vector<2x128xf32> to vector<2x32xf32>
    %56 = vector.extract_strided_slice %54 {offsets = [0, 32], sizes = [2, 32], strides = [1, 1]} : vector<2x128xf32> to vector<2x32xf32>
    %57 = vector.extract_strided_slice %50 {offsets = [0, 64], sizes = [2, 32], strides = [1, 1]} : vector<2x128xf32> to vector<2x32xf32>
    %58 = vector.extract_strided_slice %54 {offsets = [0, 96], sizes = [2, 32], strides = [1, 1]} : vector<2x128xf32> to vector<2x32xf32>
    %59 = arith.mulf %56, %44 : vector<2x32xf32>
    %60 = arith.mulf %55, %57 : vector<2x32xf32>
    %61 = arith.addf %59, %60 : vector<2x32xf32>
    %62 = math.tanh %61 : vector<2x32xf32>
    %63 = arith.mulf %58, %62 : vector<2x32xf32>
    %64 = vector.extract_strided_slice %10 {offsets = [6, 0], sizes = [2, 128], strides = [1, 1]} : vector<16x128xf32> to vector<2x128xf32>
    %cst_20 = arith.constant dense<0.000000e+00> : vector<2x128xf32>
    %65 = tpu.matmul %63, %1, %cst_20 {dimension_numbers = #tpu.dot_dimension_numbers<[1], [0], [0], [1], [0, 0, 1, 1], [], []>} : vector<2x32xf32>, vector<32x128xf32>, vector<2x128xf32> -> vector<2x128xf32>
    %66 = arith.addf %64, %65 : vector<2x128xf32>
    %67 = math.tanh %66 : vector<2x128xf32>
    %cst_21 = arith.constant 5.000000e-01 : f32
    %68 = vector.broadcast %cst_21 : f32 to vector<2x128xf32>
    %69 = arith.mulf %68, %67 : vector<2x128xf32>
    %cst_22 = arith.constant 5.000000e-01 : f32
    %70 = vector.broadcast %cst_22 : f32 to vector<2x128xf32>
    %71 = arith.addf %69, %70 : vector<2x128xf32>
    %72 = vector.extract_strided_slice %71 {offsets = [0, 0], sizes = [2, 32], strides = [1, 1]} : vector<2x128xf32> to vector<2x32xf32>
    %73 = vector.extract_strided_slice %71 {offsets = [0, 32], sizes = [2, 32], strides = [1, 1]} : vector<2x128xf32> to vector<2x32xf32>
    %74 = vector.extract_strided_slice %67 {offsets = [0, 64], sizes = [2, 32], strides = [1, 1]} : vector<2x128xf32> to vector<2x32xf32>
    %75 = vector.extract_strided_slice %71 {offsets = [0, 96], sizes = [2, 32], strides = [1, 1]} : vector<2x128xf32> to vector<2x32xf32>
    %76 = arith.mulf %73, %61 : vector<2x32xf32>
    %77 = arith.mulf %72, %74 : vector<2x32xf32>
    %78 = arith.addf %76, %77 : vector<2x32xf32>
    %79 = math.tanh %78 : vector<2x32xf32>
    %80 = arith.mulf %75, %79 : vector<2x32xf32>
    %81 = vector.extract_strided_slice %10 {offsets = [8, 0], sizes = [2, 128], strides = [1, 1]} : vector<16x128xf32> to vector<2x128xf32>
    %cst_23 = arith.constant dense<0.000000e+00> : vector<2x128xf32>
    %82 = tpu.matmul %80, %1, %cst_23 {dimension_numbers = #tpu.dot_dimension_numbers<[1], [0], [0], [1], [0, 0, 1, 1], [], []>} : vector<2x32xf32>, vector<32x128xf32>, vector<2x128xf32> -> vector<2x128xf32>
    %83 = arith.addf %81, %82 : vector<2x128xf32>
    %84 = math.tanh %83 : vector<2x128xf32>
    %cst_24 = arith.constant 5.000000e-01 : f32
    %85 = vector.broadcast %cst_24 : f32 to vector<2x128xf32>
    %86 = arith.mulf %85, %84 : vector<2x128xf32>
    %cst_25 = arith.constant 5.000000e-01 : f32
    %87 = vector.broadcast %cst_25 : f32 to vector<2x128xf32>
    %88 = arith.addf %86, %87 : vector<2x128xf32>
    %89 = vector.extract_strided_slice %88 {offsets = [0, 0], sizes = [2, 32], strides = [1, 1]} : vector<2x128xf32> to vector<2x32xf32>
    %90 = vector.extract_strided_slice %88 {offsets = [0, 32], sizes = [2, 32], strides = [1, 1]} : vector<2x128xf32> to vector<2x32xf32>
    %91 = vector.extract_strided_slice %84 {offsets = [0, 64], sizes = [2, 32], strides = [1, 1]} : vector<2x128xf32> to vector<2x32xf32>
    %92 = vector.extract_strided_slice %88 {offsets = [0, 96], sizes = [2, 32], strides = [1, 1]} : vector<2x128xf32> to vector<2x32xf32>
    %93 = arith.mulf %90, %78 : vector<2x32xf32>
    %94 = arith.mulf %89, %91 : vector<2x32xf32>
    %95 = arith.addf %93, %94 : vector<2x32xf32>
    %96 = math.tanh %95 : vector<2x32xf32>
    %97 = arith.mulf %92, %96 : vector<2x32xf32>
    %98 = vector.extract_strided_slice %10 {offsets = [10, 0], sizes = [2, 128], strides = [1, 1]} : vector<16x128xf32> to vector<2x128xf32>
    %cst_26 = arith.constant dense<0.000000e+00> : vector<2x128xf32>
    %99 = tpu.matmul %97, %1, %cst_26 {dimension_numbers = #tpu.dot_dimension_numbers<[1], [0], [0], [1], [0, 0, 1, 1], [], []>} : vector<2x32xf32>, vector<32x128xf32>, vector<2x128xf32> -> vector<2x128xf32>
    %100 = arith.addf %98, %99 : vector<2x128xf32>
    %101 = math.tanh %100 : vector<2x128xf32>
    %cst_27 = arith.constant 5.000000e-01 : f32
    %102 = vector.broadcast %cst_27 : f32 to vector<2x128xf32>
    %103 = arith.mulf %102, %101 : vector<2x128xf32>
    %cst_28 = arith.constant 5.000000e-01 : f32
    %104 = vector.broadcast %cst_28 : f32 to vector<2x128xf32>
    %105 = arith.addf %103, %104 : vector<2x128xf32>
    %106 = vector.extract_strided_slice %105 {offsets = [0, 0], sizes = [2, 32], strides = [1, 1]} : vector<2x128xf32> to vector<2x32xf32>
    %107 = vector.extract_strided_slice %105 {offsets = [0, 32], sizes = [2, 32], strides = [1, 1]} : vector<2x128xf32> to vector<2x32xf32>
    %108 = vector.extract_strided_slice %101 {offsets = [0, 64], sizes = [2, 32], strides = [1, 1]} : vector<2x128xf32> to vector<2x32xf32>
    %109 = vector.extract_strided_slice %105 {offsets = [0, 96], sizes = [2, 32], strides = [1, 1]} : vector<2x128xf32> to vector<2x32xf32>
    %110 = arith.mulf %107, %95 : vector<2x32xf32>
    %111 = arith.mulf %106, %108 : vector<2x32xf32>
    %112 = arith.addf %110, %111 : vector<2x32xf32>
    %113 = math.tanh %112 : vector<2x32xf32>
    %114 = arith.mulf %109, %113 : vector<2x32xf32>
    %115 = vector.extract_strided_slice %10 {offsets = [12, 0], sizes = [2, 128], strides = [1, 1]} : vector<16x128xf32> to vector<2x128xf32>
    %cst_29 = arith.constant dense<0.000000e+00> : vector<2x128xf32>
    %116 = tpu.matmul %114, %1, %cst_29 {dimension_numbers = #tpu.dot_dimension_numbers<[1], [0], [0], [1], [0, 0, 1, 1], [], []>} : vector<2x32xf32>, vector<32x128xf32>, vector<2x128xf32> -> vector<2x128xf32>
    %117 = arith.addf %115, %116 : vector<2x128xf32>
    %118 = math.tanh %117 : vector<2x128xf32>
    %cst_30 = arith.constant 5.000000e-01 : f32
    %119 = vector.broadcast %cst_30 : f32 to vector<2x128xf32>
    %120 = arith.mulf %119, %118 : vector<2x128xf32>
    %cst_31 = arith.constant 5.000000e-01 : f32
    %121 = vector.broadcast %cst_31 : f32 to vector<2x128xf32>
    %122 = arith.addf %120, %121 : vector<2x128xf32>
    %123 = vector.extract_strided_slice %122 {offsets = [0, 0], sizes = [2, 32], strides = [1, 1]} : vector<2x128xf32> to vector<2x32xf32>
    %124 = vector.extract_strided_slice %122 {offsets = [0, 32], sizes = [2, 32], strides = [1, 1]} : vector<2x128xf32> to vector<2x32xf32>
    %125 = vector.extract_strided_slice %118 {offsets = [0, 64], sizes = [2, 32], strides = [1, 1]} : vector<2x128xf32> to vector<2x32xf32>
    %126 = vector.extract_strided_slice %122 {offsets = [0, 96], sizes = [2, 32], strides = [1, 1]} : vector<2x128xf32> to vector<2x32xf32>
    %127 = arith.mulf %124, %112 : vector<2x32xf32>
    %128 = arith.mulf %123, %125 : vector<2x32xf32>
    %129 = arith.addf %127, %128 : vector<2x32xf32>
    %130 = math.tanh %129 : vector<2x32xf32>
    %131 = arith.mulf %126, %130 : vector<2x32xf32>
    %132 = vector.extract_strided_slice %10 {offsets = [14, 0], sizes = [2, 128], strides = [1, 1]} : vector<16x128xf32> to vector<2x128xf32>
    %cst_32 = arith.constant dense<0.000000e+00> : vector<2x128xf32>
    %133 = tpu.matmul %131, %1, %cst_32 {dimension_numbers = #tpu.dot_dimension_numbers<[1], [0], [0], [1], [0, 0, 1, 1], [], []>} : vector<2x32xf32>, vector<32x128xf32>, vector<2x128xf32> -> vector<2x128xf32>
    %134 = arith.addf %132, %133 : vector<2x128xf32>
    %135 = math.tanh %134 : vector<2x128xf32>
    %cst_33 = arith.constant 5.000000e-01 : f32
    %136 = vector.broadcast %cst_33 : f32 to vector<2x128xf32>
    %137 = arith.mulf %136, %135 : vector<2x128xf32>
    %cst_34 = arith.constant 5.000000e-01 : f32
    %138 = vector.broadcast %cst_34 : f32 to vector<2x128xf32>
    %139 = arith.addf %137, %138 : vector<2x128xf32>
    %140 = vector.extract_strided_slice %139 {offsets = [0, 0], sizes = [2, 32], strides = [1, 1]} : vector<2x128xf32> to vector<2x32xf32>
    %141 = vector.extract_strided_slice %139 {offsets = [0, 32], sizes = [2, 32], strides = [1, 1]} : vector<2x128xf32> to vector<2x32xf32>
    %142 = vector.extract_strided_slice %135 {offsets = [0, 64], sizes = [2, 32], strides = [1, 1]} : vector<2x128xf32> to vector<2x32xf32>
    %143 = vector.extract_strided_slice %139 {offsets = [0, 96], sizes = [2, 32], strides = [1, 1]} : vector<2x128xf32> to vector<2x32xf32>
    %144 = arith.mulf %141, %129 : vector<2x32xf32>
    %145 = arith.mulf %140, %142 : vector<2x32xf32>
    %146 = arith.addf %144, %145 : vector<2x32xf32>
    %147 = math.tanh %146 : vector<2x32xf32>
    %148 = arith.mulf %143, %147 : vector<2x32xf32>
    %cst_35 = arith.constant dense<0.000000e+00> : vector<2x128xf32>
    %149 = tpu.matmul %148, %2, %cst_35 {dimension_numbers = #tpu.dot_dimension_numbers<[1], [0], [0], [1], [0, 0, 1, 1], [], []>} : vector<2x32xf32>, vector<32x128xf32>, vector<2x128xf32> -> vector<2x128xf32>
    %150 = vector.broadcast %4 : vector<1x128xf32> to vector<2x128xf32>
    %151 = arith.addf %149, %150 : vector<2x128xf32>
    %cst_36 = arith.constant 0.000000e+00 : f32
    %152 = vector.broadcast %cst_36 : f32 to vector<2x128xf32>
    %153 = arith.maximumf %151, %152 : vector<2x128xf32>
    %154 = vector.broadcast %5 : vector<1x128xf32> to vector<2x128xf32>
    %155 = arith.mulf %153, %154 : vector<2x128xf32>
    %cst_37 = arith.constant dense<0.000000e+00> : vector<2xf32>
    %156 = vector.multi_reduction <add>, %155, %cst_37 [1] : vector<2x128xf32> to vector<2xf32>
    %157 = vector.shape_cast %156 : vector<2xf32> to vector<2x1xf32>
    %158 = vector.broadcast %6 : vector<1x1xf32> to vector<2x1xf32>
    %159 = arith.addf %157, %158 : vector<2x1xf32>
    %160 = vector.shape_cast %159 : vector<2x1xf32> to vector<2x1xf32>
    %161 = vector.broadcast %160 : vector<2x1xf32> to vector<2x128xf32>
    %c0_38 = arith.constant 0 : index
    %c0_39 = arith.constant 0 : index
    %162 = vector.load %arg2[%c0_38, %c0_39] : memref<2x128xf32, #tpu.memory_space<vmem>>, vector<2x128xf32>
    tpu.vector_store %arg2[%c0_38, %c0_39], %161 {strides = array<i32>} : memref<2x128xf32, #tpu.memory_space<vmem>>, vector<2x128xf32>,
    return
  }
}

</mosaic_0001>

<llo_original>
// kernel: decoder_rnn_forward.1
$region0: #{decoder_rnn_forward.1}
  #allocation0 [shape = 'u32[]', space=smem, size = 0x4, offset = 0x4, fixed_abs, tag = 'smem constant byte address 0x4 - core index']
  #allocation1 [shape = 'u32[144,128]{1,0:T(1,128)}', space=vmem, size = 0x12000, scoped, tag = 'internal scratch']
  %s0 = inlined_call_operand.vmem [shape: f32[16,32], index: 0, kind: input, shape index: {}]
  %s1 = inlined_call_operand.hbm [shape: f32[100,128], index: 1, kind: input, shape index: {}]
  %s2 = inlined_call_operand.vmem [shape: f32[2,128], index: 2, kind: output, shape index: {}]
  %s3 = sld [smem:[#allocation0]]
  $region22: #{decoder_rnn_forward.1} parent=0
    _
  %s5 = ssub.s32 1, %s3
  %s6 = scalar_select 0, %s5, %s3
  $region1: #{decoder_rnn_forward.1} parent=0
    #allocation2 [shape = 'u8[53248]{0}', space=vmem, size = 0xd000, scoped, tag = 'input window, operand 1, single buffered']
    #allocation3 [shape = 's32[1]{0}', space=sflag, size = 0x4, scoped, tag = 'scoped memory for decoder_rnn_forward.1']
    %7 = vsyncpa [#allocation3], 0
    // Predicated region
    $region2: #{decoder_rnn_forward.1} parent=1 // pred_check
      _
    $region3: #{decoder_rnn_forward.1} parent=1 // pred_check_branch
      %9 = sbr.rel (0) target = $region5
    $region4: #{decoder_rnn_forward.1} parent=1 // pred_region
      _
    $region5: #{decoder_rnn_forward.1} parent=1 // pred_fallthru
      _
    // Predicated region
    $region6: #{decoder_rnn_forward.1} parent=1 // pred_check
      _
    $region7: #{decoder_rnn_forward.1} parent=1 // pred_check_branch
      %11 = sbr.rel (0) target = $region9
    $region8: #{decoder_rnn_forward.1} parent=1 // pred_region
      %s13 = ssub.s32 1664, 1664
      %14 = vsyncadd [#allocation3], %s13
      %s15 = sshll.u32 [#allocation2], 4
      %s16 = int_to_ptr.vmem [resolvable:$true] %s15
      %21 = dma.hbm_to_vmem [thread:$0]  %s1, 1664, %s16, [#allocation3], 128, 128, 8
    $region9: #{decoder_rnn_forward.1} parent=1 // pred_fallthru
      _
    // Predicated region
    $region10: #{decoder_rnn_forward.1} parent=1 // pred_check
      _
    $region11: #{decoder_rnn_forward.1} parent=1 // pred_check_branch
      %23 = sbr.rel (0) target = $region13
    $region12: #{decoder_rnn_forward.1} parent=1 // pred_region
      %24 = dma.done [#allocation3], 1664
    $region13: #{decoder_rnn_forward.1} parent=1 // pred_fallthru
      _
    %v25 = vld [vmem:[#allocation2] sm:$0xff]
    %v26 = vld [vmem:[#allocation2 + $0x8] sm:$0xff]
    %v27 = vld [vmem:[#allocation2 + $0x10] sm:$0xff]
    %v28 = vld [vmem:[#allocation2 + $0x18] sm:$0xff]
    %v29 = vld [vmem:[#allocation2 + $0x20] sm:$0xff]
    %v30 = vld [vmem:[#allocation2 + $0x28] sm:$0xff]
    %v31 = vld [vmem:[#allocation2 + $0x30] sm:$0xff]
    %v32 = vld [vmem:[#allocation2 + $0x38] sm:$0xff]
    %v33 = vld [vmem:[#allocation2 + $0x40] sm:$0xff]
    %v34 = vld [vmem:[#allocation2 + $0x48] sm:$0xff]
    %v35 = vld [vmem:[#allocation2 + $0x50] sm:$0xff]
    %v36 = vld [vmem:[#allocation2 + $0x58] sm:$0xff]
    %v37 = vld [vmem:[#allocation2 + $0x60] sm:$0x1]
    %v38 = vld [vmem:[#allocation2 + $0x61] sm:$0x1]
    %v39 = vld [vmem:[#allocation2 + $0x62] sm:$0x1]
    %v40 = vld [vmem:[#allocation2 + $0x63] sm:$0x1]
    %v41 = vld [vmem:[%s0] sm:$0xff]
    %v42 = vld [vmem:[%s0 + $0x8] sm:$0xff]
    %v43 = vlaneseq
    %v44 = vshrl.u32 %v43, 7
    %v45 = vsub.s32 0, %v44
    %v46 = vrot.slane %v37, %v45
    %vm47 = vcmask 261120
    %v49 = vsel %vm47, %v41, 0
    %v52 = vsel %vm47, %v42, 0
    %54 = vmatprep.subr.mxu0 0.0
    %55 = vmatpush1.msra.mxu0 %v25
    %56 = vmatprep.subr.mxu0 0.0
    %57 = vmatpush1.msra.mxu0 %v26
    %58 = vmatprep.subr.mxu0 0.0
    %59 = vmatpush1.msra.mxu0 %v27
    %60 = vmatprep.subr.mxu0 0.0
    %61 = vmatpush1.msra.mxu0 %v28
    %62 = vmatprep.subr.mxu0 0.0
    %63 = vmatpush1.msra.mxu0 0.0
    %64 = vmatprep.subr.mxu0 0.0
    %65 = vmatpush1.msra.mxu0 0.0
    %66 = vmatprep.subr.mxu0 0.0
    %67 = vmatpush1.msra.mxu0 0.0
    %68 = vmatprep.subr.mxu0 0.0
    %69 = vmatpush1.msra.mxu0 0.0
    %70 = vmatprep.subr.mxu0 0.0
    %71 = vmatpush1.msra.mxu0 0.0
    %72 = vmatprep.subr.mxu0 0.0
    %73 = vmatpush1.msra.mxu0 0.0
    %74 = vmatprep.subr.mxu0 0.0
    %75 = vmatpush1.msra.mxu0 0.0
    %76 = vmatprep.subr.mxu0 0.0
    %77 = vmatpush1.msra.mxu0 0.0
    %78 = vmatprep.subr.mxu0 0.0
    %79 = vmatpush1.msra.mxu0 0.0
    %80 = vmatprep.subr.mxu0 0.0
    %81 = vmatpush1.msra.mxu0 0.0
    %82 = vmatprep.subr.mxu0 0.0
    %83 = vmatpush1.msra.mxu0 0.0
    %84 = vmatprep.subr.mxu0 0.0
    %85 = vmatpush1.msra.mxu0 0.0
    %86 = vmatprep.subr.mxu0 0.0
    %87 = vmatpush1.msra.mxu0 0.0
    %88 = vmatprep.subr.mxu0 0.0
    %89 = vmatpush1.msra.mxu0 0.0
    %90 = vmatprep.subr.mxu0 0.0
    %91 = vmatpush1.msra.mxu0 0.0
    %92 = vmatprep.subr.mxu0 0.0
    %93 = vmatpush1.msra.mxu0 0.0
    %94 = vmatprep.subr.mxu0 0.0
    %95 = vmatpush1.msra.mxu0 0.0
    %96 = vmatprep.subr.mxu0 0.0
    %97 = vmatpush1.msra.mxu0 0.0
    %98 = vmatprep.subr.mxu0 0.0
    %99 = vmatpush1.msra.mxu0 0.0
    %100 = vmatprep.subr.mxu0 0.0
    %101 = vmatpush1.msra.mxu0 0.0
    %102 = vmatprep.subr.mxu0 0.0
    %103 = vmatpush1.msra.mxu0 0.0
    %104 = vmatprep.subr.mxu0 0.0
    %105 = vmatpush1.msra.mxu0 0.0
    %106 = vmatprep.subr.mxu0 0.0
    %107 = vmatpush1.msra.mxu0 0.0
    %108 = vmatprep.subr.mxu0 0.0
    %109 = vmatpush1.msra.mxu0 0.0
    %110 = vmatprep.subr.mxu0 0.0
    %111 = vmatpush1.msra.mxu0 0.0
    %112 = vmatprep.subr.mxu0 0.0
    %113 = vmatpush1.msra.mxu0 0.0
    %114 = vmatprep.subr.mxu0 0.0
    %115 = vmatpush1.msra.mxu0 0.0
    %116 = vmatprep.subr.mxu0 0.0
    %117 = vmatpush1.msra.mxu0 0.0
    %118 = vmatprep.mubr.f32.mxu0 0.0
    %119 = vmatmul.mubr.f32.gmra.mrb[0].mxu0 %v49
    %v120 = vpop.f32.mrb[0].mxu0
    %v121 = vadd.f32 %v46, %v120
    %v122 = vpop.f32.mrb[0].mxu0
    %123 = vmatprep.mubr.f32.mxu0 0.0
    %124 = vmatmul.mubr.f32.gmra.mrb[0].mxu0 %v52
    %v125 = vpop.f32.mrb[0].mxu0
    %v126 = vadd.f32 %v46, %v125
    %v127 = vpop.f32.mrb[0].mxu0
    %128 = vdwg.mxu0
    %v130 = vsel %vm47, 0.0, 0
    %132 = vmatprep.subr.mxu0 0.0
    %133 = vmatpush1.msra.mxu0 %v29
    %134 = vmatprep.subr.mxu0 0.0
    %135 = vmatpush1.msra.mxu0 %v30
    %136 = vmatprep.subr.mxu0 0.0
    %137 = vmatpush1.msra.mxu0 %v31
    %138 = vmatprep.subr.mxu0 0.0
    %139 = vmatpush1.msra.mxu0 %v32
    %140 = vmatprep.subr.mxu0 0.0
    %141 = vmatpush1.msra.mxu0 0.0
    %142 = vmatprep.subr.mxu0 0.0
    %143 = vmatpush1.msra.mxu0 0.0
    %144 = vmatprep.subr.mxu0 0.0
    %145 = vmatpush1.msra.mxu0 0.0
    %146 = vmatprep.subr.mxu0 0.0
    %147 = vmatpush1.msra.mxu0 0.0
    %148 = vmatprep.subr.mxu0 0.0
    %149 = vmatpush1.msra.mxu0 0.0
    %150 = vmatprep.subr.mxu0 0.0
    %151 = vmatpush1.msra.mxu0 0.0
    %152 = vmatprep.subr.mxu0 0.0
    %153 = vmatpush1.msra.mxu0 0.0
    %154 = vmatprep.subr.mxu0 0.0
    %155 = vmatpush1.msra.mxu0 0.0
    %156 = vmatprep.subr.mxu0 0.0
    %157 = vmatpush1.msra.mxu0 0.0
    %158 = vmatprep.subr.mxu0 0.0
    %159 = vmatpush1.msra.mxu0 0.0
    %160 = vmatprep.subr.mxu0 0.0
    %161 = vmatpush1.msra.mxu0 0.0
    %162 = vmatprep.subr.mxu0 0.0
    %163 = vmatpush1.msra.mxu0 0.0
    %164 = vmatprep.subr.mxu0 0.0
    %165 = vmatpush1.msra.mxu0 0.0
    %166 = vmatprep.subr.mxu0 0.0
    %167 = vmatpush1.msra.mxu0 0.0
    %168 = vmatprep.subr.mxu0 0.0
    %169 = vmatpush1.msra.mxu0 0.0
    %170 = vmatprep.subr.mxu0 0.0
    %171 = vmatpush1.msra.mxu0 0.0
    %172 = vmatprep.subr.mxu0 0.0
    %173 = vmatpush1.msra.mxu0 0.0
    %174 = vmatprep.subr.mxu0 0.0
    %175 = vmatpush1.msra.mxu0 0.0
    %176 = vmatprep.subr.mxu0 0.0
    %177 = vmatpush1.msra.mxu0 0.0
    %178 = vmatprep.subr.mxu0 0.0
    %179 = vmatpush1.msra.mxu0 0.0
    %180 = vmatprep.subr.mxu0 0.0
    %181 = vmatpush1.msra.mxu0 0.0
    %182 = vmatprep.subr.mxu0 0.0
    %183 = vmatpush1.msra.mxu0 0.0
    %184 = vmatprep.subr.mxu0 0.0
    %185 = vmatpush1.msra.mxu0 0.0
    %186 = vmatprep.subr.mxu0 0.0
    %187 = vmatpush1.msra.mxu0 0.0
    %188 = vmatprep.subr.mxu0 0.0
    %189 = vmatpush1.msra.mxu0 0.0
    %190 = vmatprep.subr.mxu0 0.0
    %191 = vmatpush1.msra.mxu0 0.0
    %192 = vmatprep.subr.mxu0 0.0
    %193 = vmatpush1.msra.mxu0 0.0
    %194 = vmatprep.subr.mxu0 0.0
    %195 = vmatpush1.msra.mxu0 0.0
    %196 = vmatprep.mubr.f32.mxu0 0.0
    %197 = vmatmul.mubr.f32.gmra.mrb[0].mxu0 %v130
    %v198 = vpop.f32.mrb[0].mxu0
    %v199 = vadd.f32 0.0, %v198
    %v200 = vpop.f32.mrb[0].mxu0
    %201 = vdwg.mxu0
    %v202 = vadd.f32 %v121, %v199
    %v203 = vtanh.pop %v202
    %v204 = vmul.f32 %v203, 0.5
    %v205 = vadd.f32 %v204, 0.5
    %v206 = vmul.f32 %v205, 0.0
    %208 = vrot.lane.b32.xlu0 %v203, 64
    %v209 = vpop.permute.xlu0 %208
    %v211 = vmul.f32 %v205, %v209
    %213 = vrot.lane.b32.xlu0 %v211, 32
    %v214 = vpop.permute.xlu0 %213
    %v216 = vadd.f32 %v206, %v214
    %v217 = vtanh.pop %v216
    %219 = vrot.lane.b32.xlu0 %v217, 64
    %v220 = vpop.permute.xlu0 %219
    %v222 = vmul.f32 %v205, %v220
    %224 = vrot.lane.b32.xlu0 %v222, 32
    %v225 = vpop.permute.xlu0 %224
    %v226 = vsel %vm47, %v225, 0
    %228 = vmatprep.subr.mxu0 0.0
    %229 = vmatpush1.msra.mxu0 %v29
    %230 = vmatprep.subr.mxu0 0.0
    %231 = vmatpush1.msra.mxu0 %v30
    %232 = vmatprep.subr.mxu0 0.0
    %233 = vmatpush1.msra.mxu0 %v31
    %234 = vmatprep.subr.mxu0 0.0
    %235 = vmatpush1.msra.mxu0 %v32
    %236 = vmatprep.subr.mxu0 0.0
    %237 = vmatpush1.msra.mxu0 0.0
    %238 = vmatprep.subr.mxu0 0.0
    %239 = vmatpush1.msra.mxu0 0.0
    %240 = vmatprep.subr.mxu0 0.0
    %241 = vmatpush1.msra.mxu0 0.0
    %242 = vmatprep.subr.mxu0 0.0
    %243 = vmatpush1.msra.mxu0 0.0
    %244 = vmatprep.subr.mxu0 0.0
    %245 = vmatpush1.msra.mxu0 0.0
    %246 = vmatprep.subr.mxu0 0.0
    %247 = vmatpush1.msra.mxu0 0.0
    %248 = vmatprep.subr.mxu0 0.0
    %249 = vmatpush1.msra.mxu0 0.0
    %250 = vmatprep.subr.mxu0 0.0
    %251 = vmatpush1.msra.mxu0 0.0
    %252 = vmatprep.subr.mxu0 0.0
    %253 = vmatpush1.msra.mxu0 0.0
    %254 = vmatprep.subr.mxu0 0.0
    %255 = vmatpush1.msra.mxu0 0.0
    %256 = vmatprep.subr.mxu0 0.0
    %257 = vmatpush1.msra.mxu0 0.0
    %258 = vmatprep.subr.mxu0 0.0
    %259 = vmatpush1.msra.mxu0 0.0
    %260 = vmatprep.subr.mxu0 0.0
    %261 = vmatpush1.msra.mxu0 0.0
    %262 = vmatprep.subr.mxu0 0.0
    %263 = vmatpush1.msra.mxu0 0.0
    %264 = vmatprep.subr.mxu0 0.0
    %265 = vmatpush1.msra.mxu0 0.0
    %266 = vmatprep.subr.mxu0 0.0
    %267 = vmatpush1.msra.mxu0 0.0
    %268 = vmatprep.subr.mxu0 0.0
    %269 = vmatpush1.msra.mxu0 0.0
    %270 = vmatprep.subr.mxu0 0.0
    %271 = vmatpush1.msra.mxu0 0.0
    %272 = vmatprep.subr.mxu0 0.0
    %273 = vmatpush1.msra.mxu0 0.0
    %274 = vmatprep.subr.mxu0 0.0
    %275 = vmatpush1.msra.mxu0 0.0
    %276 = vmatprep.subr.mxu0 0.0
    %277 = vmatpush1.msra.mxu0 0.0
    %278 = vmatprep.subr.mxu0 0.0
    %279 = vmatpush1.msra.mxu0 0.0
    %280 = vmatprep.subr.mxu0 0.0
    %281 = vmatpush1.msra.mxu0 0.0
    %282 = vmatprep.subr.mxu0 0.0
    %283 = vmatpush1.msra.mxu0 0.0
    %284 = vmatprep.subr.mxu0 0.0
    %285 = vmatpush1.msra.mxu0 0.0
    %286 = vmatprep.subr.mxu0 0.0
    %287 = vmatpush1.msra.mxu0 0.0
    %288 = vmatprep.subr.mxu0 0.0
    %289 = vmatpush1.msra.mxu0 0.0
    %290 = vmatprep.subr.mxu0 0.0
    %291 = vmatpush1.msra.mxu0 0.0
    %292 = vmatprep.mubr.f32.mxu0 0.0
    %293 = vmatmul.mubr.f32.gmra.mrb[0].mxu0 %v226
    %v294 = vpop.f32.mrb[0].mxu0
    %v295 = vadd.f32 0.0, %v294
    %v296 = vpop.f32.mrb[0].mxu0
    %297 = vdwg.mxu0
    %v299 = vrot.slane %v295, 6
    %v301 = vadd.f32 %v121, %v299
    %v302 = vtanh.pop %v301
    %v303 = vmul.f32 %v302, 0.5
    %v304 = vadd.f32 %v303, 0.5
    %v306 = vrot.slane %v216, 6
    %v308 = vmul.f32 %v304, %v306
    %310 = vrot.lane.b32.xlu0 %v302, 64
    %v311 = vpop.permute.xlu0 %310
    %v313 = vmul.f32 %v304, %v311
    %315 = vrot.lane.b32.xlu0 %v313, 32
    %v316 = vpop.permute.xlu0 %315
    %v318 = vadd.f32 %v308, %v316
    %v319 = vtanh.pop %v318
    %321 = vrot.lane.b32.xlu0 %v319, 64
    %v322 = vpop.permute.xlu0 %321
    %v324 = vmul.f32 %v304, %v322
    %v326 = vrot.slane %v324, 2
    %327 = vrot.lane.b32.xlu0 %v326, 32
    %v328 = vpop.permute.xlu0 %327
    %v329 = vsel %vm47, %v328, 0
    %331 = vmatprep.subr.mxu0 0.0
    %332 = vmatpush1.msra.mxu0 %v29
    %333 = vmatprep.subr.mxu0 0.0
    %334 = vmatpush1.msra.mxu0 %v30
    %335 = vmatprep.subr.mxu0 0.0
    %336 = vmatpush1.msra.mxu0 %v31
    %337 = vmatprep.subr.mxu0 0.0
    %338 = vmatpush1.msra.mxu0 %v32
    %339 = vmatprep.subr.mxu0 0.0
    %340 = vmatpush1.msra.mxu0 0.0
    %341 = vmatprep.subr.mxu0 0.0
    %342 = vmatpush1.msra.mxu0 0.0
    %343 = vmatprep.subr.mxu0 0.0
    %344 = vmatpush1.msra.mxu0 0.0
    %345 = vmatprep.subr.mxu0 0.0
    %346 = vmatpush1.msra.mxu0 0.0
    %347 = vmatprep.subr.mxu0 0.0
    %348 = vmatpush1.msra.mxu0 0.0
    %349 = vmatprep.subr.mxu0 0.0
    %350 = vmatpush1.msra.mxu0 0.0
    %351 = vmatprep.subr.mxu0 0.0
    %352 = vmatpush1.msra.mxu0 0.0
    %353 = vmatprep.subr.mxu0 0.0
    %354 = vmatpush1.msra.mxu0 0.0
    %355 = vmatprep.subr.mxu0 0.0
    %356 = vmatpush1.msra.mxu0 0.0
    %357 = vmatprep.subr.mxu0 0.0
    %358 = vmatpush1.msra.mxu0 0.0
    %359 = vmatprep.subr.mxu0 0.0
    %360 = vmatpush1.msra.mxu0 0.0
    %361 = vmatprep.subr.mxu0 0.0
    %362 = vmatpush1.msra.mxu0 0.0
    %363 = vmatprep.subr.mxu0 0.0
    %364 = vmatpush1.msra.mxu0 0.0
    %365 = vmatprep.subr.mxu0 0.0
    %366 = vmatpush1.msra.mxu0 0.0
    %367 = vmatprep.subr.mxu0 0.0
    %368 = vmatpush1.msra.mxu0 0.0
    %369 = vmatprep.subr.mxu0 0.0
    %370 = vmatpush1.msra.mxu0 0.0
    %371 = vmatprep.subr.mxu0 0.0
    %372 = vmatpush1.msra.mxu0 0.0
    %373 = vmatprep.subr.mxu0 0.0
    %374 = vmatpush1.msra.mxu0 0.0
    %375 = vmatprep.subr.mxu0 0.0
    %376 = vmatpush1.msra.mxu0 0.0
    %377 = vmatprep.subr.mxu0 0.0
    %378 = vmatpush1.msra.mxu0 0.0
    %379 = vmatprep.subr.mxu0 0.0
    %380 = vmatpush1.msra.mxu0 0.0
    %381 = vmatprep.subr.mxu0 0.0
    %382 = vmatpush1.msra.mxu0 0.0
    %383 = vmatprep.subr.mxu0 0.0
    %384 = vmatpush1.msra.mxu0 0.0
    %385 = vmatprep.subr.mxu0 0.0
    %386 = vmatpush1.msra.mxu0 0.0
    %387 = vmatprep.subr.mxu0 0.0
    %388 = vmatpush1.msra.mxu0 0.0
    %389 = vmatprep.subr.mxu0 0.0
    %390 = vmatpush1.msra.mxu0 0.0
    %391 = vmatprep.subr.mxu0 0.0
    %392 = vmatpush1.msra.mxu0 0.0
    %393 = vmatprep.subr.mxu0 0.0
    %394 = vmatpush1.msra.mxu0 0.0
    %395 = vmatprep.mubr.f32.mxu0 0.0
    %396 = vmatmul.mubr.f32.gmra.mrb[0].mxu0 %v329
    %v397 = vpop.f32.mrb[0].mxu0
    %v398 = vadd.f32 0.0, %v397
    %v399 = vpop.f32.mrb[0].mxu0
    %400 = vdwg.mxu0
    %v402 = vrot.slane %v398, 4
    %v404 = vadd.f32 %v121, %v402
    %v405 = vtanh.pop %v404
    %v406 = vmul.f32 %v405, 0.5
    %v407 = vadd.f32 %v406, 0.5
    %v409 = vrot.slane %v318, 6
    %v411 = vmul.f32 %v407, %v409
    %413 = vrot.lane.b32.xlu0 %v405, 64
    %v414 = vpop.permute.xlu0 %413
    %v416 = vmul.f32 %v407, %v414
    %418 = vrot.lane.b32.xlu0 %v416, 32
    %v419 = vpop.permute.xlu0 %418
    %v421 = vadd.f32 %v411, %v419
    %v422 = vtanh.pop %v421
    %424 = vrot.lane.b32.xlu0 %v422, 64
    %v425 = vpop.permute.xlu0 %424
    %v427 = vmul.f32 %v407, %v425
    %v429 = vrot.slane %v427, 4
    %430 = vrot.lane.b32.xlu0 %v429, 32
    %v431 = vpop.permute.xlu0 %430
    %v432 = vsel %vm47, %v431, 0
    %434 = vmatprep.subr.mxu0 0.0
    %435 = vmatpush1.msra.mxu0 %v29
    %436 = vmatprep.subr.mxu0 0.0
    %437 = vmatpush1.msra.mxu0 %v30
    %438 = vmatprep.subr.mxu0 0.0
    %439 = vmatpush1.msra.mxu0 %v31
    %440 = vmatprep.subr.mxu0 0.0
    %441 = vmatpush1.msra.mxu0 %v32
    %442 = vmatprep.subr.mxu0 0.0
    %443 = vmatpush1.msra.mxu0 0.0
    %444 = vmatprep.subr.mxu0 0.0
    %445 = vmatpush1.msra.mxu0 0.0
    %446 = vmatprep.subr.mxu0 0.0
    %447 = vmatpush1.msra.mxu0 0.0
    %448 = vmatprep.subr.mxu0 0.0
    %449 = vmatpush1.msra.mxu0 0.0
    %450 = vmatprep.subr.mxu0 0.0
    %451 = vmatpush1.msra.mxu0 0.0
    %452 = vmatprep.subr.mxu0 0.0
    %453 = vmatpush1.msra.mxu0 0.0
    %454 = vmatprep.subr.mxu0 0.0
    %455 = vmatpush1.msra.mxu0 0.0
    %456 = vmatprep.subr.mxu0 0.0
    %457 = vmatpush1.msra.mxu0 0.0
    %458 = vmatprep.subr.mxu0 0.0
    %459 = vmatpush1.msra.mxu0 0.0
    %460 = vmatprep.subr.mxu0 0.0
    %461 = vmatpush1.msra.mxu0 0.0
    %462 = vmatprep.subr.mxu0 0.0
    %463 = vmatpush1.msra.mxu0 0.0
    %464 = vmatprep.subr.mxu0 0.0
    %465 = vmatpush1.msra.mxu0 0.0
    %466 = vmatprep.subr.mxu0 0.0
    %467 = vmatpush1.msra.mxu0 0.0
    %468 = vmatprep.subr.mxu0 0.0
    %469 = vmatpush1.msra.mxu0 0.0
    %470 = vmatprep.subr.mxu0 0.0
    %471 = vmatpush1.msra.mxu0 0.0
    %472 = vmatprep.subr.mxu0 0.0
    %473 = vmatpush1.msra.mxu0 0.0
    %474 = vmatprep.subr.mxu0 0.0
    %475 = vmatpush1.msra.mxu0 0.0
    %476 = vmatprep.subr.mxu0 0.0
    %477 = vmatpush1.msra.mxu0 0.0
    %478 = vmatprep.subr.mxu0 0.0
    %479 = vmatpush1.msra.mxu0 0.0
    %480 = vmatprep.subr.mxu0 0.0
    %481 = vmatpush1.msra.mxu0 0.0
    %482 = vmatprep.subr.mxu0 0.0
    %483 = vmatpush1.msra.mxu0 0.0
    %484 = vmatprep.subr.mxu0 0.0
    %485 = vmatpush1.msra.mxu0 0.0
    %486 = vmatprep.subr.mxu0 0.0
    %487 = vmatpush1.msra.mxu0 0.0
    %488 = vmatprep.subr.mxu0 0.0
    %489 = vmatpush1.msra.mxu0 0.0
    %490 = vmatprep.subr.mxu0 0.0
    %491 = vmatpush1.msra.mxu0 0.0
    %492 = vmatprep.subr.mxu0 0.0
    %493 = vmatpush1.msra.mxu0 0.0
    %494 = vmatprep.subr.mxu0 0.0
    %495 = vmatpush1.msra.mxu0 0.0
    %496 = vmatprep.subr.mxu0 0.0
    %497 = vmatpush1.msra.mxu0 0.0
    %498 = vmatprep.mubr.f32.mxu0 0.0
    %499 = vmatmul.mubr.f32.gmra.mrb[0].mxu0 %v432
    %v500 = vpop.f32.mrb[0].mxu0
    %v501 = vadd.f32 0.0, %v500
    %v502 = vpop.f32.mrb[0].mxu0
    %503 = vdwg.mxu0
    %v505 = vrot.slane %v501, 2
    %v507 = vadd.f32 %v121, %v505
    %v508 = vtanh.pop %v507
    %v509 = vmul.f32 %v508, 0.5
    %v510 = vadd.f32 %v509, 0.5
    %v512 = vrot.slane %v421, 6
    %v514 = vmul.f32 %v510, %v512
    %516 = vrot.lane.b32.xlu0 %v508, 64
    %v517 = vpop.permute.xlu0 %516
    %v519 = vmul.f32 %v510, %v517
    %521 = vrot.lane.b32.xlu0 %v519, 32
    %v522 = vpop.permute.xlu0 %521
    %v524 = vadd.f32 %v514, %v522
    %v525 = vtanh.pop %v524
    %527 = vrot.lane.b32.xlu0 %v525, 64
    %v528 = vpop.permute.xlu0 %527
    %v530 = vmul.f32 %v510, %v528
    %v532 = vrot.slane %v530, 6
    %533 = vrot.lane.b32.xlu0 %v532, 32
    %v534 = vpop.permute.xlu0 %533
    %v535 = vsel %vm47, %v534, 0
    %537 = vmatprep.subr.mxu0 0.0
    %538 = vmatpush1.msra.mxu0 %v29
    %539 = vmatprep.subr.mxu0 0.0
    %540 = vmatpush1.msra.mxu0 %v30
    %541 = vmatprep.subr.mxu0 0.0
    %542 = vmatpush1.msra.mxu0 %v31
    %543 = vmatprep.subr.mxu0 0.0
    %544 = vmatpush1.msra.mxu0 %v32
    %545 = vmatprep.subr.mxu0 0.0
    %546 = vmatpush1.msra.mxu0 0.0
    %547 = vmatprep.subr.mxu0 0.0
    %548 = vmatpush1.msra.mxu0 0.0
    %549 = vmatprep.subr.mxu0 0.0
    %550 = vmatpush1.msra.mxu0 0.0
    %551 = vmatprep.subr.mxu0 0.0
    %552 = vmatpush1.msra.mxu0 0.0
    %553 = vmatprep.subr.mxu0 0.0
    %554 = vmatpush1.msra.mxu0 0.0
    %555 = vmatprep.subr.mxu0 0.0
    %556 = vmatpush1.msra.mxu0 0.0
    %557 = vmatprep.subr.mxu0 0.0
    %558 = vmatpush1.msra.mxu0 0.0
    %559 = vmatprep.subr.mxu0 0.0
    %560 = vmatpush1.msra.mxu0 0.0
    %561 = vmatprep.subr.mxu0 0.0
    %562 = vmatpush1.msra.mxu0 0.0
    %563 = vmatprep.subr.mxu0 0.0
    %564 = vmatpush1.msra.mxu0 0.0
    %565 = vmatprep.subr.mxu0 0.0
    %566 = vmatpush1.msra.mxu0 0.0
    %567 = vmatprep.subr.mxu0 0.0
    %568 = vmatpush1.msra.mxu0 0.0
    %569 = vmatprep.subr.mxu0 0.0
    %570 = vmatpush1.msra.mxu0 0.0
    %571 = vmatprep.subr.mxu0 0.0
    %572 = vmatpush1.msra.mxu0 0.0
    %573 = vmatprep.subr.mxu0 0.0
    %574 = vmatpush1.msra.mxu0 0.0
    %575 = vmatprep.subr.mxu0 0.0
    %576 = vmatpush1.msra.mxu0 0.0
    %577 = vmatprep.subr.mxu0 0.0
    %578 = vmatpush1.msra.mxu0 0.0
    %579 = vmatprep.subr.mxu0 0.0
    %580 = vmatpush1.msra.mxu0 0.0
    %581 = vmatprep.subr.mxu0 0.0
    %582 = vmatpush1.msra.mxu0 0.0
    %583 = vmatprep.subr.mxu0 0.0
    %584 = vmatpush1.msra.mxu0 0.0
    %585 = vmatprep.subr.mxu0 0.0
    %586 = vmatpush1.msra.mxu0 0.0
    %587 = vmatprep.subr.mxu0 0.0
    %588 = vmatpush1.msra.mxu0 0.0
    %589 = vmatprep.subr.mxu0 0.0
    %590 = vmatpush1.msra.mxu0 0.0
    %591 = vmatprep.subr.mxu0 0.0
    %592 = vmatpush1.msra.mxu0 0.0
    %593 = vmatprep.subr.mxu0 0.0
    %594 = vmatpush1.msra.mxu0 0.0
    %595 = vmatprep.subr.mxu0 0.0
    %596 = vmatpush1.msra.mxu0 0.0
    %597 = vmatprep.subr.mxu0 0.0
    %598 = vmatpush1.msra.mxu0 0.0
    %599 = vmatprep.subr.mxu0 0.0
    %600 = vmatpush1.msra.mxu0 0.0
    %601 = vmatprep.mubr.f32.mxu0 0.0
    %602 = vmatmul.mubr.f32.gmra.mrb[0].mxu0 %v535
    %v603 = vpop.f32.mrb[0].mxu0
    %v604 = vadd.f32 0.0, %v603
    %v605 = vpop.f32.mrb[0].mxu0
    %606 = vdwg.mxu0
    %v607 = vadd.f32 %v126, %v604
    %v608 = vtanh.pop %v607
    %v609 = vmul.f32 %v608, 0.5
    %v610 = vadd.f32 %v609, 0.5
    %v612 = vrot.slane %v524, 6
    %v614 = vmul.f32 %v610, %v612
    %616 = vrot.lane.b32.xlu0 %v608, 64
    %v617 = vpop.permute.xlu0 %616
    %v619 = vmul.f32 %v610, %v617
    %621 = vrot.lane.b32.xlu0 %v619, 32
    %v622 = vpop.permute.xlu0 %621
    %v624 = vadd.f32 %v614, %v622
    %v625 = vtanh.pop %v624
    %627 = vrot.lane.b32.xlu0 %v625, 64
    %v628 = vpop.permute.xlu0 %627
    %v630 = vmul.f32 %v610, %v628
    %632 = vrot.lane.b32.xlu0 %v630, 32
    %v633 = vpop.permute.xlu0 %632
    %v634 = vsel %vm47, %v633, 0
    %636 = vmatprep.subr.mxu0 0.0
    %637 = vmatpush1.msra.mxu0 %v29
    %638 = vmatprep.subr.mxu0 0.0
    %639 = vmatpush1.msra.mxu0 %v30
    %640 = vmatprep.subr.mxu0 0.0
    %641 = vmatpush1.msra.mxu0 %v31
    %642 = vmatprep.subr.mxu0 0.0
    %643 = vmatpush1.msra.mxu0 %v32
    %644 = vmatprep.subr.mxu0 0.0
    %645 = vmatpush1.msra.mxu0 0.0
    %646 = vmatprep.subr.mxu0 0.0
    %647 = vmatpush1.msra.mxu0 0.0
    %648 = vmatprep.subr.mxu0 0.0
    %649 = vmatpush1.msra.mxu0 0.0
    %650 = vmatprep.subr.mxu0 0.0
    %651 = vmatpush1.msra.mxu0 0.0
    %652 = vmatprep.subr.mxu0 0.0
    %653 = vmatpush1.msra.mxu0 0.0
    %654 = vmatprep.subr.mxu0 0.0
    %655 = vmatpush1.msra.mxu0 0.0
    %656 = vmatprep.subr.mxu0 0.0
    %657 = vmatpush1.msra.mxu0 0.0
    %658 = vmatprep.subr.mxu0 0.0
    %659 = vmatpush1.msra.mxu0 0.0
    %660 = vmatprep.subr.mxu0 0.0
    %661 = vmatpush1.msra.mxu0 0.0
    %662 = vmatprep.subr.mxu0 0.0
    %663 = vmatpush1.msra.mxu0 0.0
    %664 = vmatprep.subr.mxu0 0.0
    %665 = vmatpush1.msra.mxu0 0.0
    %666 = vmatprep.subr.mxu0 0.0
    %667 = vmatpush1.msra.mxu0 0.0
    %668 = vmatprep.subr.mxu0 0.0
    %669 = vmatpush1.msra.mxu0 0.0
    %670 = vmatprep.subr.mxu0 0.0
    %671 = vmatpush1.msra.mxu0 0.0
    %672 = vmatprep.subr.mxu0 0.0
    %673 = vmatpush1.msra.mxu0 0.0
    %674 = vmatprep.subr.mxu0 0.0
    %675 = vmatpush1.msra.mxu0 0.0
    %676 = vmatprep.subr.mxu0 0.0
    %677 = vmatpush1.msra.mxu0 0.0
    %678 = vmatprep.subr.mxu0 0.0
    %679 = vmatpush1.msra.mxu0 0.0
    %680 = vmatprep.subr.mxu0 0.0
    %681 = vmatpush1.msra.mxu0 0.0
    %682 = vmatprep.subr.mxu0 0.0
    %683 = vmatpush1.msra.mxu0 0.0
    %684 = vmatprep.subr.mxu0 0.0
    %685 = vmatpush1.msra.mxu0 0.0
    %686 = vmatprep.subr.mxu0 0.0
    %687 = vmatpush1.msra.mxu0 0.0
    %688 = vmatprep.subr.mxu0 0.0
    %689 = vmatpush1.msra.mxu0 0.0
    %690 = vmatprep.subr.mxu0 0.0
    %691 = vmatpush1.msra.mxu0 0.0
    %692 = vmatprep.subr.mxu0 0.0
    %693 = vmatpush1.msra.mxu0 0.0
    %694 = vmatprep.subr.mxu0 0.0
    %695 = vmatpush1.msra.mxu0 0.0
    %696 = vmatprep.subr.mxu0 0.0
    %697 = vmatpush1.msra.mxu0 0.0
    %698 = vmatprep.subr.mxu0 0.0
    %699 = vmatpush1.msra.mxu0 0.0
    %700 = vmatprep.mubr.f32.mxu0 0.0
    %701 = vmatmul.mubr.f32.gmra.mrb[0].mxu0 %v634
    %v702 = vpop.f32.mrb[0].mxu0
    %v703 = vadd.f32 0.0, %v702
    %v704 = vpop.f32.mrb[0].mxu0
    %705 = vdwg.mxu0
    %v707 = vrot.slane %v703, 6
    %v709 = vadd.f32 %v126, %v707
    %v710 = vtanh.pop %v709
    %v711 = vmul.f32 %v710, 0.5
    %v712 = vadd.f32 %v711, 0.5
    %v714 = vrot.slane %v624, 6
    %v716 = vmul.f32 %v712, %v714
    %718 = vrot.lane.b32.xlu0 %v710, 64
    %v719 = vpop.permute.xlu0 %718
    %v721 = vmul.f32 %v712, %v719
    %723 = vrot.lane.b32.xlu0 %v721, 32
    %v724 = vpop.permute.xlu0 %723
    %v726 = vadd.f32 %v716, %v724
    %v727 = vtanh.pop %v726
    %729 = vrot.lane.b32.xlu0 %v727, 64
    %v730 = vpop.permute.xlu0 %729
    %v732 = vmul.f32 %v712, %v730
    %v734 = vrot.slane %v732, 2
    %735 = vrot.lane.b32.xlu0 %v734, 32
    %v736 = vpop.permute.xlu0 %735
    %v737 = vsel %vm47, %v736, 0
    %739 = vmatprep.subr.mxu0 0.0
    %740 = vmatpush1.msra.mxu0 %v29
    %741 = vmatprep.subr.mxu0 0.0
    %742 = vmatpush1.msra.mxu0 %v30
    %743 = vmatprep.subr.mxu0 0.0
    %744 = vmatpush1.msra.mxu0 %v31
    %745 = vmatprep.subr.mxu0 0.0
    %746 = vmatpush1.msra.mxu0 %v32
    %747 = vmatprep.subr.mxu0 0.0
    %748 = vmatpush1.msra.mxu0 0.0
    %749 = vmatprep.subr.mxu0 0.0
    %750 = vmatpush1.msra.mxu0 0.0
    %751 = vmatprep.subr.mxu0 0.0
    %752 = vmatpush1.msra.mxu0 0.0
    %753 = vmatprep.subr.mxu0 0.0
    %754 = vmatpush1.msra.mxu0 0.0
    %755 = vmatprep.subr.mxu0 0.0
    %756 = vmatpush1.msra.mxu0 0.0
    %757 = vmatprep.subr.mxu0 0.0
    %758 = vmatpush1.msra.mxu0 0.0
    %759 = vmatprep.subr.mxu0 0.0
    %760 = vmatpush1.msra.mxu0 0.0
    %761 = vmatprep.subr.mxu0 0.0
    %762 = vmatpush1.msra.mxu0 0.0
    %763 = vmatprep.subr.mxu0 0.0
    %764 = vmatpush1.msra.mxu0 0.0
    %765 = vmatprep.subr.mxu0 0.0
    %766 = vmatpush1.msra.mxu0 0.0
    %767 = vmatprep.subr.mxu0 0.0
    %768 = vmatpush1.msra.mxu0 0.0
    %769 = vmatprep.subr.mxu0 0.0
    %770 = vmatpush1.msra.mxu0 0.0
    %771 = vmatprep.subr.mxu0 0.0
    %772 = vmatpush1.msra.mxu0 0.0
    %773 = vmatprep.subr.mxu0 0.0
    %774 = vmatpush1.msra.mxu0 0.0
    %775 = vmatprep.subr.mxu0 0.0
    %776 = vmatpush1.msra.mxu0 0.0
    %777 = vmatprep.subr.mxu0 0.0
    %778 = vmatpush1.msra.mxu0 0.0
    %779 = vmatprep.subr.mxu0 0.0
    %780 = vmatpush1.msra.mxu0 0.0
    %781 = vmatprep.subr.mxu0 0.0
    %782 = vmatpush1.msra.mxu0 0.0
    %783 = vmatprep.subr.mxu0 0.0
    %784 = vmatpush1.msra.mxu0 0.0
    %785 = vmatprep.subr.mxu0 0.0
    %786 = vmatpush1.msra.mxu0 0.0
    %787 = vmatprep.subr.mxu0 0.0
    %788 = vmatpush1.msra.mxu0 0.0
    %789 = vmatprep.subr.mxu0 0.0
    %790 = vmatpush1.msra.mxu0 0.0
    %791 = vmatprep.subr.mxu0 0.0
    %792 = vmatpush1.msra.mxu0 0.0
    %793 = vmatprep.subr.mxu0 0.0
    %794 = vmatpush1.msra.mxu0 0.0
    %795 = vmatprep.subr.mxu0 0.0
    %796 = vmatpush1.msra.mxu0 0.0
    %797 = vmatprep.subr.mxu0 0.0
    %798 = vmatpush1.msra.mxu0 0.0
    %799 = vmatprep.subr.mxu0 0.0
    %800 = vmatpush1.msra.mxu0 0.0
    %801 = vmatprep.subr.mxu0 0.0
    %802 = vmatpush1.msra.mxu0 0.0
    %803 = vmatprep.mubr.f32.mxu0 0.0
    %804 = vmatmul.mubr.f32.gmra.mrb[0].mxu0 %v737
    %v805 = vpop.f32.mrb[0].mxu0
    %v806 = vadd.f32 0.0, %v805
    %v807 = vpop.f32.mrb[0].mxu0
    %808 = vdwg.mxu0
    %v810 = vrot.slane %v806, 4
    %v812 = vadd.f32 %v126, %v810
    %v813 = vtanh.pop %v812
    %v814 = vmul.f32 %v813, 0.5
    %v815 = vadd.f32 %v814, 0.5
    %v817 = vrot.slane %v726, 6
    %v819 = vmul.f32 %v815, %v817
    %821 = vrot.lane.b32.xlu0 %v813, 64
    %v822 = vpop.permute.xlu0 %821
    %v824 = vmul.f32 %v815, %v822
    %826 = vrot.lane.b32.xlu0 %v824, 32
    %v827 = vpop.permute.xlu0 %826
    %v829 = vadd.f32 %v819, %v827
    %v830 = vtanh.pop %v829
    %832 = vrot.lane.b32.xlu0 %v830, 64
    %v833 = vpop.permute.xlu0 %832
    %v835 = vmul.f32 %v815, %v833
    %v837 = vrot.slane %v835, 4
    %838 = vrot.lane.b32.xlu0 %v837, 32
    %v839 = vpop.permute.xlu0 %838
    %v840 = vsel %vm47, %v839, 0
    %842 = vmatprep.subr.mxu0 0.0
    %843 = vmatpush1.msra.mxu0 %v29
    %844 = vmatprep.subr.mxu0 0.0
    %845 = vmatpush1.msra.mxu0 %v30
    %846 = vmatprep.subr.mxu0 0.0
    %847 = vmatpush1.msra.mxu0 %v31
    %848 = vmatprep.subr.mxu0 0.0
    %849 = vmatpush1.msra.mxu0 %v32
    %850 = vmatprep.subr.mxu0 0.0
    %851 = vmatpush1.msra.mxu0 0.0
    %852 = vmatprep.subr.mxu0 0.0
    %853 = vmatpush1.msra.mxu0 0.0
    %854 = vmatprep.subr.mxu0 0.0
    %855 = vmatpush1.msra.mxu0 0.0
    %856 = vmatprep.subr.mxu0 0.0
    %857 = vmatpush1.msra.mxu0 0.0
    %858 = vmatprep.subr.mxu0 0.0
    %859 = vmatpush1.msra.mxu0 0.0
    %860 = vmatprep.subr.mxu0 0.0
    %861 = vmatpush1.msra.mxu0 0.0
    %862 = vmatprep.subr.mxu0 0.0
    %863 = vmatpush1.msra.mxu0 0.0
    %864 = vmatprep.subr.mxu0 0.0
    %865 = vmatpush1.msra.mxu0 0.0
    %866 = vmatprep.subr.mxu0 0.0
    %867 = vmatpush1.msra.mxu0 0.0
    %868 = vmatprep.subr.mxu0 0.0
    %869 = vmatpush1.msra.mxu0 0.0
    %870 = vmatprep.subr.mxu0 0.0
    %871 = vmatpush1.msra.mxu0 0.0
    %872 = vmatprep.subr.mxu0 0.0
    %873 = vmatpush1.msra.mxu0 0.0
    %874 = vmatprep.subr.mxu0 0.0
    %875 = vmatpush1.msra.mxu0 0.0
    %876 = vmatprep.subr.mxu0 0.0
    %877 = vmatpush1.msra.mxu0 0.0
    %878 = vmatprep.subr.mxu0 0.0
    %879 = vmatpush1.msra.mxu0 0.0
    %880 = vmatprep.subr.mxu0 0.0
    %881 = vmatpush1.msra.mxu0 0.0
    %882 = vmatprep.subr.mxu0 0.0
    %883 = vmatpush1.msra.mxu0 0.0
    %884 = vmatprep.subr.mxu0 0.0
    %885 = vmatpush1.msra.mxu0 0.0
    %886 = vmatprep.subr.mxu0 0.0
    %887 = vmatpush1.msra.mxu0 0.0
    %888 = vmatprep.subr.mxu0 0.0
    %889 = vmatpush1.msra.mxu0 0.0
    %890 = vmatprep.subr.mxu0 0.0
    %891 = vmatpush1.msra.mxu0 0.0
    %892 = vmatprep.subr.mxu0 0.0
    %893 = vmatpush1.msra.mxu0 0.0
    %894 = vmatprep.subr.mxu0 0.0
    %895 = vmatpush1.msra.mxu0 0.0
    %896 = vmatprep.subr.mxu0 0.0
    %897 = vmatpush1.msra.mxu0 0.0
    %898 = vmatprep.subr.mxu0 0.0
    %899 = vmatpush1.msra.mxu0 0.0
    %900 = vmatprep.subr.mxu0 0.0
    %901 = vmatpush1.msra.mxu0 0.0
    %902 = vmatprep.subr.mxu0 0.0
    %903 = vmatpush1.msra.mxu0 0.0
    %904 = vmatprep.subr.mxu0 0.0
    %905 = vmatpush1.msra.mxu0 0.0
    %906 = vmatprep.mubr.f32.mxu0 0.0
    %907 = vmatmul.mubr.f32.gmra.mrb[0].mxu0 %v840
    %v908 = vpop.f32.mrb[0].mxu0
    %v909 = vadd.f32 0.0, %v908
    %v910 = vpop.f32.mrb[0].mxu0
    %911 = vdwg.mxu0
    %v913 = vrot.slane %v909, 2
    %v915 = vadd.f32 %v126, %v913
    %v916 = vtanh.pop %v915
    %v917 = vmul.f32 %v916, 0.5
    %v918 = vadd.f32 %v917, 0.5
    %v920 = vrot.slane %v829, 6
    %v922 = vmul.f32 %v918, %v920
    %924 = vrot.lane.b32.xlu0 %v916, 64
    %v925 = vpop.permute.xlu0 %924
    %v927 = vmul.f32 %v918, %v925
    %929 = vrot.lane.b32.xlu0 %v927, 32
    %v930 = vpop.permute.xlu0 %929
    %v932 = vadd.f32 %v922, %v930
    %v933 = vtanh.pop %v932
    %935 = vrot.lane.b32.xlu0 %v933, 64
    %v936 = vpop.permute.xlu0 %935
    %v938 = vmul.f32 %v918, %v936
    %v939 = vlaneseq
    %v940 = vshrl.u32 %v939, 7
    %v941 = vsub.s32 0, %v940
    %v942 = vrot.slane %v38, %v941
    %v944 = vrot.slane %v938, 6
    %945 = vrot.lane.b32.xlu0 %v944, 32
    %v946 = vpop.permute.xlu0 %945
    %v947 = vsel %vm47, %v946, 0
    %949 = vmatprep.subr.mxu0 0.0
    %950 = vmatpush1.msra.mxu0 %v33
    %951 = vmatprep.subr.mxu0 0.0
    %952 = vmatpush1.msra.mxu0 %v34
    %953 = vmatprep.subr.mxu0 0.0
    %954 = vmatpush1.msra.mxu0 %v35
    %955 = vmatprep.subr.mxu0 0.0
    %956 = vmatpush1.msra.mxu0 %v36
    %957 = vmatprep.subr.mxu0 0.0
    %958 = vmatpush1.msra.mxu0 0.0
    %959 = vmatprep.subr.mxu0 0.0
    %960 = vmatpush1.msra.mxu0 0.0
    %961 = vmatprep.subr.mxu0 0.0
    %962 = vmatpush1.msra.mxu0 0.0
    %963 = vmatprep.subr.mxu0 0.0
    %964 = vmatpush1.msra.mxu0 0.0
    %965 = vmatprep.subr.mxu0 0.0
    %966 = vmatpush1.msra.mxu0 0.0
    %967 = vmatprep.subr.mxu0 0.0
    %968 = vmatpush1.msra.mxu0 0.0
    %969 = vmatprep.subr.mxu0 0.0
    %970 = vmatpush1.msra.mxu0 0.0
    %971 = vmatprep.subr.mxu0 0.0
    %972 = vmatpush1.msra.mxu0 0.0
    %973 = vmatprep.subr.mxu0 0.0
    %974 = vmatpush1.msra.mxu0 0.0
    %975 = vmatprep.subr.mxu0 0.0
    %976 = vmatpush1.msra.mxu0 0.0
    %977 = vmatprep.subr.mxu0 0.0
    %978 = vmatpush1.msra.mxu0 0.0
    %979 = vmatprep.subr.mxu0 0.0
    %980 = vmatpush1.msra.mxu0 0.0
    %981 = vmatprep.subr.mxu0 0.0
    %982 = vmatpush1.msra.mxu0 0.0
    %983 = vmatprep.subr.mxu0 0.0
    %984 = vmatpush1.msra.mxu0 0.0
    %985 = vmatprep.subr.mxu0 0.0
    %986 = vmatpush1.msra.mxu0 0.0
    %987 = vmatprep.subr.mxu0 0.0
    %988 = vmatpush1.msra.mxu0 0.0
    %989 = vmatprep.subr.mxu0 0.0
    %990 = vmatpush1.msra.mxu0 0.0
    %991 = vmatprep.subr.mxu0 0.0
    %992 = vmatpush1.msra.mxu0 0.0
    %993 = vmatprep.subr.mxu0 0.0
    %994 = vmatpush1.msra.mxu0 0.0
    %995 = vmatprep.subr.mxu0 0.0
    %996 = vmatpush1.msra.mxu0 0.0
    %997 = vmatprep.subr.mxu0 0.0
    %998 = vmatpush1.msra.mxu0 0.0
    %999 = vmatprep.subr.mxu0 0.0
    %1000 = vmatpush1.msra.mxu0 0.0
    %1001 = vmatprep.subr.mxu0 0.0
    %1002 = vmatpush1.msra.mxu0 0.0
    %1003 = vmatprep.subr.mxu0 0.0
    %1004 = vmatpush1.msra.mxu0 0.0
    %1005 = vmatprep.subr.mxu0 0.0
    %1006 = vmatpush1.msra.mxu0 0.0
    %1007 = vmatprep.subr.mxu0 0.0
    %1008 = vmatpush1.msra.mxu0 0.0
    %1009 = vmatprep.subr.mxu0 0.0
    %1010 = vmatpush1.msra.mxu0 0.0
    %1011 = vmatprep.subr.mxu0 0.0
    %1012 = vmatpush1.msra.mxu0 0.0
    %1013 = vmatprep.mubr.f32.mxu0 0.0
    %1014 = vmatmul.mubr.f32.gmra.mrb[0].mxu0 %v947
    %v1015 = vpop.f32.mrb[0].mxu0
    %v1016 = vadd.f32 %v942, %v1015
    %v1017 = vpop.f32.mrb[0].mxu0
    %1018 = vdwg.mxu0
    %v1019 = vmax.f32 %v1016, 0.0
    %v1020 = vlaneseq
    %v1021 = vshrl.u32 %v1020, 7
    %v1022 = vsub.s32 0, %v1021
    %v1023 = vrot.slane %v39, %v1022
    %v1024 = vmul.f32 %v1019, %v1023
    %vm1025 = vcmask 1041408
    %v1026 = vsel %vm1025, %v1024, 0.0
    %1027 = vadd.xlane.f32.xlu0 %v1026
    %v1028 = vpop.xlane.xlu0 %1027
    %v1029 = vlaneseq
    %v1030 = vshrl.u32 %v1029, 7
    %v1031 = vsub.s32 0, %v1030
    %v1032 = vrot.slane %v40, %v1031
    %v1033 = vadd.f32 %v1028, %v1032
    %1035 = vset.pattern.permute.xlu0 0
    %1036 = vperm.xlu0 %1035, %v1033
    %v1037 = vpop.permute.xlu0 %1036
    %1039 = vst [vmem:[%s2] sm:$0x3] %v1037
    // Predicated region
    $region14: #{decoder_rnn_forward.1} parent=1 // pred_check
      _
    $region15: #{decoder_rnn_forward.1} parent=1 // pred_check_branch
      %1041 = sbr.rel (0) target = $region17
    $region16: #{decoder_rnn_forward.1} parent=1 // pred_region
      _
    $region17: #{decoder_rnn_forward.1} parent=1 // pred_fallthru
      _
    // Predicated region
    $region18: #{decoder_rnn_forward.1} parent=1 // pred_check
      _
    $region19: #{decoder_rnn_forward.1} parent=1 // pred_check_branch
      %1043 = sbr.rel (0) target = $region21
    $region20: #{decoder_rnn_forward.1} parent=1 // pred_region
      _
    $region21: #{decoder_rnn_forward.1} parent=1 // pred_fallthru
      _
    %1044 = vsyncpa [#allocation3], 1

</llo_original>
